<compile_context>
chip_gen: v7x
topology: tpu7x:2x2x1
jax: 0.10.0
libtpu: 0.0.40
codegen_flags: <defaults>
</compile_context>

<pallas_src>
import functools
import math

import jax
import jax.numpy as jnp
from jax import lax
from jax.experimental import pallas as pl
from jax.experimental.pallas import tpu as pltpu


_ROW_ALIGN = 32  # multiple of every sublane packing (f32: 8, bf16: 16, int8: 32)


def _masked_sumsq_kernel(x_ref, y_ref, keep_ref, out_ref, acc_ref, *,
                         n_rows, tile_rows, steps_per_chunk, groups, group_width):
    """Accumulates sum((x - y)^2 * keep) for one row-chunk of the input."""
    c = pl.program_id(0)          # parallel chunk (TensorCore) index
    t = pl.program_id(1)          # sequential step within the chunk

    @pl.when(t == 0)
    def _():
        acc_ref[...] = jnp.zeros_like(acc_ref)

    # Unclamped linear block id so that (a) out-of-range tail rows of the last
    # block and (b) duplicate blocks (from a non-even parallel split) contribute
    # exactly zero.
    lin_blk = c * steps_per_chunk + t
    row = lin_blk * tile_rows + lax.broadcasted_iota(jnp.int32, (tile_rows, 1), 0)
    row_valid = row < n_rows                                         # (tile_rows, 1)

    diff = x_ref[...].astype(jnp.float32) - y_ref[...].astype(jnp.float32)
    sq = diff * diff                                                 # (tile_rows, C)

    if groups == 1:
        keep = keep_ref[...] != 0                                    # (tile_rows, 1)
        cond = jnp.logical_and(keep, row_valid)
    else:
        # Lane-dense layout: each kernel row packs `groups` original rows of
        # width `group_width` into 128 lanes.  Expand the per-original-row keep
        # flags across their lane group with a tiny 0/1 bf16 matmul against a
        # constant selector (the MXU is completely idle in this kernel).
        width = groups * group_width
        col = lax.broadcasted_iota(jnp.int32, (groups, width), 1)
        grp = lax.broadcasted_iota(jnp.int32, (groups, width), 0)
        one = jnp.ones((), jnp.bfloat16)
        zero = jnp.zeros((), jnp.bfloat16)
        sel = jnp.where(col // group_width == grp, one, zero)        # (groups, C)
        keep_lane = jnp.dot(keep_ref[...], sel,
                            preferred_element_type=jnp.float32)      # (tile_rows, C)
        cond = jnp.logical_and(keep_lane != 0.0, row_valid)

    # where() (not multiply) so garbage in OOB/masked positions can never leak
    # a NaN into the sum.
    masked = jnp.where(cond, sq, 0.0)

    c_dim = x_ref.shape[-1]
    # Cheap VPU partial reduction into a vreg-shaped accumulator — no per-step
    # cross-lane/cross-sublane (XLU) reduce, no serial scalar dependence.
    acc_ref[...] += masked.reshape(tile_rows // 8, 8, c_dim).sum(axis=0)

    @pl.when(t == pl.num_programs(1) - 1)
    def _():
        out_ref[...] = acc_ref[...][None]                            # (1, 8, C)


def _generation_defaults():
    """(num_parallel_chunks, vmem_budget_bytes, vmem_limit_bytes) per TPU gen."""
    try:
        kind = jax.devices()[0].device_kind.lower()
    except Exception:
        kind = ""
    if "v2" in kind or "v3" in kind:
        # Old 16 MiB-VMEM cores: stay small, keep the default scoped limit.
        return 2, 6 * 1024 * 1024, None
    if any(s in kind for s in ("v5e", "v5 lite", "v5lite", "v6e", "v6 lite", "v6lite")):
        # Single TensorCore per chip, 128 MiB physical VMEM: no parallel split,
        # generous scoped VMEM for big tiles.
        return 1, 28 * 1024 * 1024, 64 * 1024 * 1024
    # v7x (2 TCs, 64 MiB VMEM per TC), v4/v5p megacore, unknown: 2-way split so
    # both cores' DMA engines stream, conservative per-core VMEM.
    return 2, 18 * 1024 * 1024, 40 * 1024 * 1024


def masked_mse_loss(pred, gt, mask, *, tile_rows=None, num_parallel_chunks=None,
                    vmem_budget_bytes=None, allow_lane_dense=True):
    """Pallas implementation of MaskedMSELoss.forward.

    pred, gt: (..., D) float arrays; mask: boolean array of shape pred.shape[:-1]
    (True = excluded).  Returns a scalar f32 loss (NaN if everything is masked,
    matching torch's mean over an empty selection).
    """
    D = pred.shape[-1]
    N = int(math.prod(pred.shape[:-1])) if pred.ndim > 1 else 1

    def_chunks, def_budget, vmem_limit = _generation_defaults()
    if num_parallel_chunks is None:
        num_parallel_chunks = def_chunks
    if vmem_budget_bytes is None:
        vmem_budget_bytes = def_budget

    def build(groups):
        C = D * groups
        R = N // groups
        x2 = pred.reshape(R, C)
        y2 = gt.reshape(R, C)
        # Keep flag (1 = use element) per *original* row, grouped per kernel row.
        keep2 = jnp.logical_not(mask).reshape(R, groups).astype(jnp.bfloat16)

        itemsize = jnp.dtype(pred.dtype).itemsize
        c_vmem = pl.cdiv(C, 128) * 128               # lane-padded width in VMEM
        # Honest per-row VMEM accounting:
        #   pred + gt, double-buffered .......... 2 * 2 * c_vmem * itemsize
        #   bf16 keep tile, lane-padded, x2 ..... 2 * 128 * 2
        #   tile-sized f32 intermediates ........ 4 * c_vmem * 4
        #   (upcasts / diff / masked sq / expanded keep)
        per_row = (2 * 2 * c_vmem * itemsize
                   + 2 * 128 * 2
                   + 4 * c_vmem * 4)

        user_tile = tile_rows is not None
        tr = int(tile_rows) if user_tile else int(vmem_budget_bytes // per_row)
        tr = max(_ROW_ALIGN, (tr // _ROW_ALIGN) * _ROW_ALIGN)
        tr = min(tr, pl.cdiv(R, _ROW_ALIGN) * _ROW_ALIGN)

        n_blocks = pl.cdiv(R, tr)
        chunks = max(1, min(int(num_parallel_chunks), n_blocks))
        if (not user_tile) and chunks > 1 and (n_blocks % chunks):
            # Balance blocks across chunks so the last chunk does not re-read a
            # clamped duplicate block (a wasted full pred+gt DMA).
            target = pl.cdiv(n_blocks, chunks) * chunks
            tr = max(_ROW_ALIGN,
                     pl.cdiv(pl.cdiv(R, target), _ROW_ALIGN) * _ROW_ALIGN)
            n_blocks = pl.cdiv(R, tr)
            chunks = max(1, min(int(num_parallel_chunks), n_blocks))
        steps = pl.cdiv(n_blocks, chunks)

        def row_block(c, t):
            # Clamp so the DMA never targets a fully out-of-bounds block;
            # duplicate blocks are zeroed in-kernel via the row iota.
            return (jnp.minimum(c * steps + t, n_blocks - 1), 0)

        kernel = functools.partial(
            _masked_sumsq_kernel,
            n_rows=R, tile_rows=tr, steps_per_chunk=steps,
            groups=groups, group_width=D)

        return pl.pallas_call(
            kernel,
            out_shape=jax.ShapeDtypeStruct((chunks, 8, C), jnp.float32),
            grid_spec=pltpu.PrefetchScalarGridSpec(
                num_scalar_prefetch=0,
                grid=(chunks, steps),
                in_specs=[
                    pl.BlockSpec((tr, C), row_block),
                    pl.BlockSpec((tr, C), row_block),
                    pl.BlockSpec((tr, groups), row_block),
                ],
                out_specs=pl.BlockSpec((1, 8, C), lambda c, t: (c, 0, 0)),
                scratch_shapes=[pltpu.VMEM((8, C), jnp.float32)],
            ),
            compiler_params=pltpu.CompilerParams(
                dimension_semantics=("parallel", "arbitrary"),
                vmem_limit_bytes=vmem_limit,
            ),
        )(x2, y2, keep2)

    # Lane-dense path: pack g = 128 // D original rows into each 128-lane row.
    groups = 1
    if allow_lane_dense and 0 < D < 128 and 128 % D == 0:
        g = 128 // D
        if g > 1 and N % g == 0:
            groups = g

    if groups > 1:
        try:
            partial_sums = build(groups)
        except Exception:
            # Safety net: if the lane-dense expansion fails to lower on this
            # backend, fall back to the plain (rows, D) layout.
            partial_sums = build(1)
    else:
        partial_sums = build(1)

    sum_sq = jnp.sum(partial_sums)
    # Denominator computed outside the kernel: the mask is only N values.
    denom = jnp.sum(jnp.logical_not(mask).astype(jnp.float32)) * jnp.float32(D)
    # All-masked input -> 0/0 = NaN, matching torch.mean over an empty selection.
    return sum_sq / denom


def _reference(pred, gt, mask):
    keep = jnp.logical_not(mask).astype(jnp.float32)[..., None]
    num = jnp.sum((pred.astype(jnp.float32) - gt.astype(jnp.float32)) ** 2 * keep)
    den = jnp.sum(keep) * pred.shape[-1]
    return num / den


if __name__ == "__main__":
    key = jax.random.PRNGKey(0)
    k1, k2, k3 = jax.random.split(key, 3)

    # Test 1: main small case, lane-dense path (D=32 -> 4 rows per 128 lanes),
    # single block.  pred/gt (B, S, D), mask (B, S).
    B, S, D = 2, 64, 32
    pred = jax.random.normal(k1, (B, S, D), dtype=jnp.float32)
    gt = jax.random.normal(k2, (B, S, D), dtype=jnp.float32)
    mask = jax.random.bernoulli(k3, p=0.4, shape=(B, S))  # True = excluded
    loss = masked_mse_loss(pred, gt, mask)
    jax.block_until_ready(loss)
    assert jnp.allclose(loss, _reference(pred, gt, mask), rtol=1e-5, atol=1e-6)

    # Test 2: lane-dense + forced small tiles + 2 "parallel" chunks with an odd
    # block count -> exercises tail-row masking, duplicate-block clamping and
    # the multi-chunk output combine.
    p2 = jax.random.normal(k1, (4, 80, 32), dtype=jnp.float32)
    g2 = jax.random.normal(k2, (4, 80, 32), dtype=jnp.float32)
    m2 = jax.random.bernoulli(k3, p=0.3, shape=(4, 80))
    loss2 = masked_mse_loss(p2, g2, m2, tile_rows=32, num_parallel_chunks=2)
    jax.block_until_ready(loss2)
    assert jnp.allclose(loss2, _reference(p2, g2, m2), rtol=1e-5, atol=1e-6)

    # Test 3: bf16 inputs stay bf16 through the DMA, lane-dense with D=64,
    # f32 accumulation in-kernel.
    p3 = jax.random.normal(k1, (4, 24, 64), dtype=jnp.bfloat16)
    g3 = jax.random.normal(k2, (4, 24, 64), dtype=jnp.bfloat16)
    m3 = jax.random.bernoulli(k3, p=0.5, shape=(4, 24))
    loss3 = masked_mse_loss(p3, g3, m3)
    jax.block_until_ready(loss3)
    assert jnp.allclose(loss3, _reference(p3, g3, m3), rtol=1e-3, atol=1e-5)

    # Test 4: feature dim that does not divide 128 -> general (rows, D) path,
    # with a tail-row overhang in the last (only) block.
    p4 = jax.random.normal(k1, (3, 10, 48), dtype=jnp.float32)
    g4 = jax.random.normal(k2, (3, 10, 48), dtype=jnp.float32)
    m4 = jax.random.bernoulli(k3, p=0.3, shape=(3, 10))
    loss4 = masked_mse_loss(p4, g4, m4)
    jax.block_until_ready(loss4)
    assert jnp.allclose(loss4, _reference(p4, g4, m4), rtol=1e-5, atol=1e-6)

    print("KERNEL_OK")
</pallas_src>

<mosaic_0001>
module attributes {stable_mosaic.version = 11 : i64} {
  func.func @_masked_sumsq_kernel(%arg0: i32, %arg1: i32, %arg2: memref<128x32xf32, #tpu.memory_space<vmem>>, %arg3: memref<128x32xf32, #tpu.memory_space<vmem>>, %arg4: memref<128x1xbf16, #tpu.memory_space<vmem>>, %arg5: memref<1x8x32xf32, #tpu.memory_space<vmem>>, %arg6: memref<8x32xf32, #tpu.memory_space<vmem>>) attributes {dimension_semantics = [#tpu.dimension_semantics<parallel>, #tpu.dimension_semantics<arbitrary>], iteration_bounds = array<i64: 1, 1>, scalar_prefetch = 0 : i64, scratch_operands = 1 : i64, tpu.core_type = #tpu.core_type<tc>, window_params = [{transform_indices = @transform_0, window_bounds = array<i64: 128, 32>}, {transform_indices = @transform_1, window_bounds = array<i64: 128, 32>}, {transform_indices = @transform_2, window_bounds = array<i64: 128, 1>}, {transform_indices = @transform_3, window_bounds = array<i64: 1, 8, 32>}]} {
    %c0_i32 = arith.constant 0 : i32
    %0 = arith.cmpi eq, %arg1, %c0_i32 : i32
    %1 = arith.extui %0 : i1 to i32
    %c0_i32_0 = arith.constant 0 : i32
    %2 = arith.cmpi ne, %1, %c0_i32_0 : i32
    scf.if %2 {
      %cst_15 = arith.constant 0.000000e+00 : f32
      %31 = vector.broadcast %cst_15 : f32 to vector<8x32xf32>
      %c0_16 = arith.constant 0 : index
      %c0_17 = arith.constant 0 : index
      %32 = vector.load %arg6[%c0_16, %c0_17] : memref<8x32xf32, #tpu.memory_space<vmem>>, vector<8x32xf32>
      tpu.vector_store %arg6[%c0_16, %c0_17], %31 {strides = array<i32>} : memref<8x32xf32, #tpu.memory_space<vmem>>, vector<8x32xf32>,
    } else {
    }
    %c1_i32 = arith.constant 1 : i32
    %3 = arith.muli %arg0, %c1_i32 : i32
    %4 = arith.addi %3, %arg1 : i32
    %c128_i32 = arith.constant 128 : i32
    %5 = arith.muli %4, %c128_i32 : i32
    %6 = tpu.iota {dimensions = array<i32: 0>} : vector<128x1xi32>
    %7 = vector.broadcast %5 : i32 to vector<128x1xi32>
    %8 = arith.addi %7, %6 : vector<128x1xi32>
    %c128_i32_1 = arith.constant 128 : i32
    %9 = vector.broadcast %c128_i32_1 : i32 to vector<128x1xi32>
    %10 = arith.cmpi slt, %8, %9 : vector<128x1xi32>
    %c0 = arith.constant 0 : index
    %c0_2 = arith.constant 0 : index
    %11 = vector.load %arg2[%c0, %c0_2] : memref<128x32xf32, #tpu.memory_space<vmem>>, vector<128x32xf32>
    %c0_3 = arith.constant 0 : index
    %c0_4 = arith.constant 0 : index
    %12 = vector.load %arg3[%c0_3, %c0_4] : memref<128x32xf32, #tpu.memory_space<vmem>>, vector<128x32xf32>
    %13 = arith.subf %11, %12 : vector<128x32xf32>
    %14 = arith.mulf %13, %13 : vector<128x32xf32>
    %c0_5 = arith.constant 0 : index
    %c0_6 = arith.constant 0 : index
    %15 = vector.load %arg4[%c0_5, %c0_6] : memref<128x1xbf16, #tpu.memory_space<vmem>>, vector<128x1xbf16>
    %cst = arith.constant 0.000000e+00 : bf16
    %16 = vector.broadcast %cst : bf16 to vector<128x1xbf16>
    %17 = arith.cmpf one, %15, %16 : vector<128x1xbf16>
    %18 = arith.andi %17, %10 : vector<128x1xi1>
    %cst_7 = arith.constant 0.000000e+00 : f32
    %19 = vector.shape_cast %18 : vector<128x1xi1> to vector<128x1xi1>
    %20 = vector.broadcast %19 : vector<128x1xi1> to vector<128x32xi1>
    %21 = vector.broadcast %cst_7 : f32 to vector<128x32xf32>
    %22 = arith.select %20, %14, %21 : vector<128x32xi1>, vector<128x32xf32>
    %c0_8 = arith.constant 0 : index
    %c0_9 = arith.constant 0 : index
    %23 = vector.load %arg6[%c0_8, %c0_9] : memref<8x32xf32, #tpu.memory_space<vmem>>, vector<8x32xf32>
    %24 = vector.shape_cast %22 : vector<128x32xf32> to vector<16x8x32xf32>
    %cst_10 = arith.constant dense<0.000000e+00> : vector<8x32xf32>
    %25 = vector.multi_reduction <add>, %24, %cst_10 [0] : vector<16x8x32xf32> to vector<8x32xf32>
    %26 = arith.addf %23, %25 : vector<8x32xf32>
    %c0_11 = arith.constant 0 : index
    %c0_12 = arith.constant 0 : index
    %27 = vector.load %arg6[%c0_11, %c0_12] : memref<8x32xf32, #tpu.memory_space<vmem>>, vector<8x32xf32>
    tpu.vector_store %arg6[%c0_11, %c0_12], %26 {strides = array<i32>} : memref<8x32xf32, #tpu.memory_space<vmem>>, vector<8x32xf32>,
    %c0_i32_13 = arith.constant 0 : i32
    %28 = arith.cmpi eq, %arg1, %c0_i32_13 : i32
    %29 = arith.extui %28 : i1 to i32
    %c0_i32_14 = arith.constant 0 : i32
    %30 = arith.cmpi ne, %29, %c0_i32_14 : i32
    scf.if %30 {
      %c0_15 = arith.constant 0 : index
      %c0_16 = arith.constant 0 : index
      %31 = vector.load %arg6[%c0_15, %c0_16] : memref<8x32xf32, #tpu.memory_space<vmem>>, vector<8x32xf32>
      %32 = vector.shape_cast %31 : vector<8x32xf32> to vector<1x8x32xf32>
      %c0_17 = arith.constant 0 : index
      %c0_18 = arith.constant 0 : index
      %c0_19 = arith.constant 0 : index
      %33 = vector.load %arg5[%c0_17, %c0_18, %c0_19] : memref<1x8x32xf32, #tpu.memory_space<vmem>>, vector<1x8x32xf32>
      tpu.vector_store %arg5[%c0_17, %c0_18, %c0_19], %32 {strides = array<i32>} : memref<1x8x32xf32, #tpu.memory_space<vmem>>, vector<1x8x32xf32>,
    } else {
    }
    return
  }
  func.func @transform_0(%arg0: i32, %arg1: i32) -> (i32, i32) {
    %c1_i32 = arith.constant 1 : i32
    %0 = arith.muli %arg0, %c1_i32 : i32
    %1 = arith.addi %0, %arg1 : i32
    %c0_i32 = arith.constant 0 : i32
    %2 = arith.minsi %1, %c0_i32 : i32
    %c0_i32_0 = arith.constant 0 : i32
    %c0_i32_1 = arith.constant 0 : i32
    return %2, %c0_i32_0 : i32, i32
  }
  func.func @transform_1(%arg0: i32, %arg1: i32) -> (i32, i32) {
    %c1_i32 = arith.constant 1 : i32
    %0 = arith.muli %arg0, %c1_i32 : i32
    %1 = arith.addi %0, %arg1 : i32
    %c0_i32 = arith.constant 0 : i32
    %2 = arith.minsi %1, %c0_i32 : i32
    %c0_i32_0 = arith.constant 0 : i32
    %c0_i32_1 = arith.constant 0 : i32
    return %2, %c0_i32_0 : i32, i32
  }
  func.func @transform_2(%arg0: i32, %arg1: i32) -> (i32, i32) {
    %c1_i32 = arith.constant 1 : i32
    %0 = arith.muli %arg0, %c1_i32 : i32
    %1 = arith.addi %0, %arg1 : i32
    %c0_i32 = arith.constant 0 : i32
    %2 = arith.minsi %1, %c0_i32 : i32
    %c0_i32_0 = arith.constant 0 : i32
    %c0_i32_1 = arith.constant 0 : i32
    return %2, %c0_i32_0 : i32, i32
  }
  func.func @transform_3(%arg0: i32, %arg1: i32) -> (i32, i32, i32) {
    %c0_i32 = arith.constant 0 : i32
    %c0_i32_0 = arith.constant 0 : i32
    %c0_i32_1 = arith.constant 0 : i32
    return %arg0, %c0_i32, %c0_i32_0 : i32, i32, i32
  }
}

</mosaic_0001>

<llo_original>
// kernel: tpu_custom_call.1
$region0: #{tpu_custom_call.1}
  #allocation0 [shape = 'u32[]', space=smem, size = 0x4, offset = 0x4, fixed_abs, tag = 'smem constant byte address 0x4 - core index']
  #allocation1 [shape = 'u32[144,128]{1,0:T(1,128)}', space=vmem, size = 0x12000, scoped, tag = 'internal scratch']
  #allocation2 [shape = 'f32[8,32]{1,0:T(8,128)}', space=vmem, size = 0x1000, scoped, tag = 'scratch operand']
  %s0 = inlined_call_operand.vmem [shape: f32[128,32], index: 0, kind: input, shape index: {}]
  %s1 = inlined_call_operand.vmem [shape: f32[128,32], index: 1, kind: input, shape index: {}]
  %s2 = inlined_call_operand.vmem [shape: bf16[128,1], index: 2, kind: input, shape index: {}]
  %s3 = inlined_call_operand.hbm [shape: f32[1,8,32], index: 3, kind: output, shape index: {}]
  %s4 = sld [smem:[#allocation0]]
  $region30: #{tpu_custom_call.1} parent=0
    _
  %s6 = ssub.s32 1, %s4
  %s7 = scalar_select 0, %s6, %s4
  $region1: #{tpu_custom_call.1} parent=0
    #allocation3 [shape = 'u8[4096]{0}', space=vmem, size = 0x1000, scoped, tag = 'output window, operand 0, single buffered']
    #allocation4 [shape = 's32[1]{0}', space=sflag, size = 0x4, scoped, tag = 'scoped memory for tpu_custom_call.1']
    %8 = vsyncpa [#allocation4], 0
    // Predicated region
    $region2: #{tpu_custom_call.1} parent=1 // pred_check
      _
    $region3: #{tpu_custom_call.1} parent=1 // pred_check_branch
      %10 = sbr.rel (0) target = $region5
    $region4: #{tpu_custom_call.1} parent=1 // pred_region
      %s11 = sadd.s32 0, 0
      %p12 = scmp.lt.s32.totalorder %s11, 0
      %s13 = scalar_select %p12, %s11, 0
      %s14 = smul.u32 16, %s13
      %p15 = scmp.lt.s32.totalorder %s14, 15
      %s16 = scalar_select %p15, %s14, 15
      %s17 = smul.addr %s16, 8
      %s18 = scalar_lea.vmem %s0, %s17
      %s19 = sadd.s32 0, 0
      %p20 = scmp.lt.s32.totalorder %s19, 0
      %s21 = scalar_select %p20, %s19, 0
      %s22 = smul.u32 16, %s21
    $region5: #{tpu_custom_call.1} parent=1 // pred_fallthru
      _
    // Predicated region
    $region6: #{tpu_custom_call.1} parent=1 // pred_check
      _
    $region7: #{tpu_custom_call.1} parent=1 // pred_check_branch
      %24 = sbr.rel (0) target = $region9
    $region8: #{tpu_custom_call.1} parent=1 // pred_region
      %s25 = sadd.s32 0, 0
      %p26 = scmp.lt.s32.totalorder %s25, 0
      %s27 = scalar_select %p26, %s25, 0
      %s28 = smul.u32 16, %s27
      %p29 = scmp.lt.s32.totalorder %s28, 15
      %s30 = scalar_select %p29, %s28, 15
      %s31 = smul.addr %s30, 8
      %s32 = scalar_lea.vmem %s1, %s31
      %s33 = sadd.s32 0, 0
      %p34 = scmp.lt.s32.totalorder %s33, 0
      %s35 = scalar_select %p34, %s33, 0
      %s36 = smul.u32 16, %s35
    $region9: #{tpu_custom_call.1} parent=1 // pred_fallthru
      _
    // Predicated region
    $region10: #{tpu_custom_call.1} parent=1 // pred_check
      _
    $region11: #{tpu_custom_call.1} parent=1 // pred_check_branch
      %38 = sbr.rel (0) target = $region13
    $region12: #{tpu_custom_call.1} parent=1 // pred_region
      %s39 = sadd.s32 0, 0
      %p40 = scmp.lt.s32.totalorder %s39, 0
      %s41 = scalar_select %p40, %s39, 0
      %s42 = smul.u32 16, %s41
      %p43 = scmp.lt.s32.totalorder %s42, 15
      %s44 = scalar_select %p43, %s42, 15
      %s45 = smul.addr %s44, 4
      %s46 = scalar_lea.vmem %s2, %s45
      %s47 = sadd.s32 0, 0
      %p48 = scmp.lt.s32.totalorder %s47, 0
      %s49 = scalar_select %p48, %s47, 0
      %s50 = smul.u32 16, %s49
    $region13: #{tpu_custom_call.1} parent=1 // pred_fallthru
      _
    %s51 = sadd.s32 0, 0
    %p52 = scmp.lt.s32.totalorder %s51, 0
    %s53 = scalar_select %p52, %s51, 0
    %s54 = smul.u32 16, %s53
    %p55 = scmp.lt.s32.totalorder %s54, 15
    %s56 = scalar_select %p55, %s54, 15
    %s57 = smul.addr %s56, 8
    %s58 = scalar_lea.vmem %s0, %s57
    %s59 = sadd.s32 0, 0
    %p60 = scmp.lt.s32.totalorder %s59, 0
    %s61 = scalar_select %p60, %s59, 0
    %s62 = smul.u32 16, %s61
    %p63 = scmp.lt.s32.totalorder %s62, 15
    %s64 = scalar_select %p63, %s62, 15
    %s65 = smul.addr %s64, 8
    %s66 = scalar_lea.vmem %s1, %s65
    %s67 = sadd.s32 0, 0
    %p68 = scmp.lt.s32.totalorder %s67, 0
    %s69 = scalar_select %p68, %s67, 0
    %s70 = smul.u32 16, %s69
    %p71 = scmp.lt.s32.totalorder %s70, 15
    %s72 = scalar_select %p71, %s70, 15
    %s73 = smul.addr %s72, 4
    %s74 = scalar_lea.vmem %s2, %s73
    %s75 = sadd.s32 0, 0
    %p76 = scmp.lt.s32.totalorder %s75, 0
    %s77 = scalar_select %p76, %s75, 0
    %s78 = smul.u32 16, %s77
    %p79 = scmp.lt.s32.totalorder %s78, 15
    %s80 = scalar_select %p79, %s78, 15
    %s81 = smul.addr %s80, 8
    %s82 = scalar_lea.vmem %s0, %s81
    %s83 = sadd.s32 0, 0
    %p84 = scmp.lt.s32.totalorder %s83, 0
    %s85 = scalar_select %p84, %s83, 0
    %s86 = smul.u32 16, %s85
    %s87 = sadd.s32 0, 0
    %p88 = scmp.lt.s32.totalorder %s87, 0
    %s89 = scalar_select %p88, %s87, 0
    %s90 = smul.u32 16, %s89
    %p91 = scmp.lt.s32.totalorder %s90, 15
    %s92 = scalar_select %p91, %s90, 15
    %s93 = smul.addr %s92, 8
    %s94 = scalar_lea.vmem %s1, %s93
    %s95 = sadd.s32 0, 0
    %p96 = scmp.lt.s32.totalorder %s95, 0
    %s97 = scalar_select %p96, %s95, 0
    %s98 = smul.u32 16, %s97
    %s99 = sadd.s32 0, 0
    %p100 = scmp.lt.s32.totalorder %s99, 0
    %s101 = scalar_select %p100, %s99, 0
    %s102 = smul.u32 16, %s101
    %p103 = scmp.lt.s32.totalorder %s102, 15
    %s104 = scalar_select %p103, %s102, 15
    %s105 = smul.addr %s104, 4
    %s106 = scalar_lea.vmem %s2, %s105
    %s107 = sadd.s32 0, 0
    %p108 = scmp.lt.s32.totalorder %s107, 0
    %s109 = scalar_select %p108, %s107, 0
    %s110 = smul.u32 16, %s109
    %p114 = scmp.eq.s32.totalorder 0, 0
    // Predicated region
    $region14: #{tpu_custom_call.1} parent=1 // pred_check
      %p115 = pneg %p114
    $region15: #{tpu_custom_call.1} parent=1 // pred_check_branch
      %117 = sbr.rel (%p115) target = $region17
    $region16: #{tpu_custom_call.1} parent=1 // pred_region
      %vm118 = vcmask 261120
      %119 = vst.msk [vmem:[#allocation2] sm:$0xff] %vm118, 0.0
    $region17: #{tpu_custom_call.1} parent=1 // pred_fallthru
      _
    %s120 = sadd.s32 0, 0
    %s121 = smul.u32 %s120, 128
    %v122 = vlaneseq
    %v123 = vshrl.u32 %v122, 7
    %v124 = vadd.s32 %v123, 8
    %v125 = vadd.s32 %v123, 16
    %v126 = vadd.s32 %v123, 24
    %v127 = vadd.s32 %v123, 32
    %v128 = vadd.s32 %v123, 40
    %v129 = vadd.s32 %v123, 48
    %v130 = vadd.s32 %v123, 56
    %v131 = vadd.s32 %v123, 64
    %v132 = vadd.s32 %v123, 72
    %v133 = vadd.s32 %v123, 80
    %v134 = vadd.s32 %v123, 88
    %v135 = vadd.s32 %v123, 96
    %v136 = vadd.s32 %v123, 104
    %v137 = vadd.s32 %v123, 112
    %v138 = vadd.s32 %v123, 120
    %v139 = vstv %s121
    %v140 = vadd.s32 %v139, %v123
    %v141 = vadd.s32 %v139, %v124
    %v142 = vadd.s32 %v139, %v125
    %v143 = vadd.s32 %v139, %v126
    %v144 = vadd.s32 %v139, %v127
    %v145 = vadd.s32 %v139, %v128
    %v146 = vadd.s32 %v139, %v129
    %v147 = vadd.s32 %v139, %v130
    %v148 = vadd.s32 %v139, %v131
    %v149 = vadd.s32 %v139, %v132
    %v150 = vadd.s32 %v139, %v133
    %v151 = vadd.s32 %v139, %v134
    %v152 = vadd.s32 %v139, %v135
    %v153 = vadd.s32 %v139, %v136
    %v154 = vadd.s32 %v139, %v137
    %v155 = vadd.s32 %v139, %v138
    %vm156 = vcmp.lt.s32.totalorder %v140, 128
    %vm157 = vcmp.lt.s32.totalorder %v141, 128
    %vm158 = vcmp.lt.s32.totalorder %v142, 128
    %vm159 = vcmp.lt.s32.totalorder %v143, 128
    %vm160 = vcmp.lt.s32.totalorder %v144, 128
    %vm161 = vcmp.lt.s32.totalorder %v145, 128
    %vm162 = vcmp.lt.s32.totalorder %v146, 128
    %vm163 = vcmp.lt.s32.totalorder %v147, 128
    %vm164 = vcmp.lt.s32.totalorder %v148, 128
    %vm165 = vcmp.lt.s32.totalorder %v149, 128
    %vm166 = vcmp.lt.s32.totalorder %v150, 128
    %vm167 = vcmp.lt.s32.totalorder %v151, 128
    %vm168 = vcmp.lt.s32.totalorder %v152, 128
    %vm169 = vcmp.lt.s32.totalorder %v153, 128
    %vm170 = vcmp.lt.s32.totalorder %v154, 128
    %vm171 = vcmp.lt.s32.totalorder %v155, 128
    %v172 = vld [vmem:[%s82] sm:$0xff]
    %v173 = vld [vmem:[%s82 + $0x8] sm:$0xff]
    %v174 = vld [vmem:[%s82 + $0x10] sm:$0xff]
    %v175 = vld [vmem:[%s82 + $0x18] sm:$0xff]
    %v176 = vld [vmem:[%s82 + $0x20] sm:$0xff]
    %v177 = vld [vmem:[%s82 + $0x28] sm:$0xff]
    %v178 = vld [vmem:[%s82 + $0x30] sm:$0xff]
    %v179 = vld [vmem:[%s82 + $0x38] sm:$0xff]
    %v180 = vld [vmem:[%s82 + $0x40] sm:$0xff]
    %v181 = vld [vmem:[%s82 + $0x48] sm:$0xff]
    %v182 = vld [vmem:[%s82 + $0x50] sm:$0xff]
    %v183 = vld [vmem:[%s82 + $0x58] sm:$0xff]
    %v184 = vld [vmem:[%s82 + $0x60] sm:$0xff]
    %v185 = vld [vmem:[%s82 + $0x68] sm:$0xff]
    %v186 = vld [vmem:[%s82 + $0x70] sm:$0xff]
    %v187 = vld [vmem:[%s82 + $0x78] sm:$0xff]
    %v188 = vld [vmem:[%s94] sm:$0xff]
    %v189 = vld [vmem:[%s94 + $0x8] sm:$0xff]
    %v190 = vld [vmem:[%s94 + $0x10] sm:$0xff]
    %v191 = vld [vmem:[%s94 + $0x18] sm:$0xff]
    %v192 = vld [vmem:[%s94 + $0x20] sm:$0xff]
    %v193 = vld [vmem:[%s94 + $0x28] sm:$0xff]
    %v194 = vld [vmem:[%s94 + $0x30] sm:$0xff]
    %v195 = vld [vmem:[%s94 + $0x38] sm:$0xff]
    %v196 = vld [vmem:[%s94 + $0x40] sm:$0xff]
    %v197 = vld [vmem:[%s94 + $0x48] sm:$0xff]
    %v198 = vld [vmem:[%s94 + $0x50] sm:$0xff]
    %v199 = vld [vmem:[%s94 + $0x58] sm:$0xff]
    %v200 = vld [vmem:[%s94 + $0x60] sm:$0xff]
    %v201 = vld [vmem:[%s94 + $0x68] sm:$0xff]
    %v202 = vld [vmem:[%s94 + $0x70] sm:$0xff]
    %v203 = vld [vmem:[%s94 + $0x78] sm:$0xff]
    %v204 = vsub.f32 %v172, %v188
    %v205 = vsub.f32 %v173, %v189
    %v206 = vsub.f32 %v174, %v190
    %v207 = vsub.f32 %v175, %v191
    %v208 = vsub.f32 %v176, %v192
    %v209 = vsub.f32 %v177, %v193
    %v210 = vsub.f32 %v178, %v194
    %v211 = vsub.f32 %v179, %v195
    %v212 = vsub.f32 %v180, %v196
    %v213 = vsub.f32 %v181, %v197
    %v214 = vsub.f32 %v182, %v198
    %v215 = vsub.f32 %v183, %v199
    %v216 = vsub.f32 %v184, %v200
    %v217 = vsub.f32 %v185, %v201
    %v218 = vsub.f32 %v186, %v202
    %v219 = vsub.f32 %v187, %v203
    %v220 = vmul.f32 %v204, %v204
    %v221 = vmul.f32 %v205, %v205
    %v222 = vmul.f32 %v206, %v206
    %v223 = vmul.f32 %v207, %v207
    %v224 = vmul.f32 %v208, %v208
    %v225 = vmul.f32 %v209, %v209
    %v226 = vmul.f32 %v210, %v210
    %v227 = vmul.f32 %v211, %v211
    %v228 = vmul.f32 %v212, %v212
    %v229 = vmul.f32 %v213, %v213
    %v230 = vmul.f32 %v214, %v214
    %v231 = vmul.f32 %v215, %v215
    %v232 = vmul.f32 %v216, %v216
    %v233 = vmul.f32 %v217, %v217
    %v234 = vmul.f32 %v218, %v218
    %v235 = vmul.f32 %v219, %v219
    %v236 = vld [vmem:[%s106] sm:$0xf]
    %v237 = vld [vmem:[%s106 + $0x4] sm:$0xf]
    %v238 = vld [vmem:[%s106 + $0x8] sm:$0xf]
    %v239 = vld [vmem:[%s106 + $0xc] sm:$0xf]
    %v240 = vld [vmem:[%s106 + $0x10] sm:$0xf]
    %v241 = vld [vmem:[%s106 + $0x14] sm:$0xf]
    %v242 = vld [vmem:[%s106 + $0x18] sm:$0xf]
    %v243 = vld [vmem:[%s106 + $0x1c] sm:$0xf]
    %v244 = vld [vmem:[%s106 + $0x20] sm:$0xf]
    %v245 = vld [vmem:[%s106 + $0x24] sm:$0xf]
    %v246 = vld [vmem:[%s106 + $0x28] sm:$0xf]
    %v247 = vld [vmem:[%s106 + $0x2c] sm:$0xf]
    %v248 = vld [vmem:[%s106 + $0x30] sm:$0xf]
    %v249 = vld [vmem:[%s106 + $0x34] sm:$0xf]
    %v250 = vld [vmem:[%s106 + $0x38] sm:$0xf]
    %v251 = vld [vmem:[%s106 + $0x3c] sm:$0xf]
    %vm252 = vcmp.ne.bf16.partialorder %v236, 0
    %vm253 = vcmp.ne.bf16.partialorder %v237, 0
    %vm254 = vcmp.ne.bf16.partialorder %v238, 0
    %vm255 = vcmp.ne.bf16.partialorder %v239, 0
    %vm256 = vcmp.ne.bf16.partialorder %v240, 0
    %vm257 = vcmp.ne.bf16.partialorder %v241, 0
    %vm258 = vcmp.ne.bf16.partialorder %v242, 0
    %vm259 = vcmp.ne.bf16.partialorder %v243, 0
    %vm260 = vcmp.ne.bf16.partialorder %v244, 0
    %vm261 = vcmp.ne.bf16.partialorder %v245, 0
    %vm262 = vcmp.ne.bf16.partialorder %v246, 0
    %vm263 = vcmp.ne.bf16.partialorder %v247, 0
    %vm264 = vcmp.ne.bf16.partialorder %v248, 0
    %vm265 = vcmp.ne.bf16.partialorder %v249, 0
    %vm266 = vcmp.ne.bf16.partialorder %v250, 0
    %vm267 = vcmp.ne.bf16.partialorder %v251, 0
    %vm268 = vmpackc.low %vm156, %vm156
    %vm269 = vmpackc.low %vm157, %vm157
    %vm270 = vmpackc.low %vm158, %vm158
    %vm271 = vmpackc.low %vm159, %vm159
    %vm272 = vmpackc.low %vm160, %vm160
    %vm273 = vmpackc.low %vm161, %vm161
    %vm274 = vmpackc.low %vm162, %vm162
    %vm275 = vmpackc.low %vm163, %vm163
    %vm276 = vmpackc.low %vm164, %vm164
    %vm277 = vmpackc.low %vm165, %vm165
    %vm278 = vmpackc.low %vm166, %vm166
    %vm279 = vmpackc.low %vm167, %vm167
    %vm280 = vmpackc.low %vm168, %vm168
    %vm281 = vmpackc.low %vm169, %vm169
    %vm282 = vmpackc.low %vm170, %vm170
    %vm283 = vmpackc.low %vm171, %vm171
    %vm284 = vmand %vm252, %vm268
    %vm285 = vmand %vm253, %vm269
    %vm286 = vmand %vm254, %vm270
    %vm287 = vmand %vm255, %vm271
    %vm288 = vmand %vm256, %vm272
    %vm289 = vmand %vm257, %vm273
    %vm290 = vmand %vm258, %vm274
    %vm291 = vmand %vm259, %vm275
    %vm292 = vmand %vm260, %vm276
    %vm293 = vmand %vm261, %vm277
    %vm294 = vmand %vm262, %vm278
    %vm295 = vmand %vm263, %vm279
    %vm296 = vmand %vm264, %vm280
    %vm297 = vmand %vm265, %vm281
    %vm298 = vmand %vm266, %vm282
    %vm299 = vmand %vm267, %vm283
    %v300 = vsel %vm284, 65537, 0
    %v301 = vsel %vm285, 65537, 0
    %v302 = vsel %vm286, 65537, 0
    %v303 = vsel %vm287, 65537, 0
    %v304 = vsel %vm288, 65537, 0
    %v305 = vsel %vm289, 65537, 0
    %v306 = vsel %vm290, 65537, 0
    %v307 = vsel %vm291, 65537, 0
    %v308 = vsel %vm292, 65537, 0
    %v309 = vsel %vm293, 65537, 0
    %v310 = vsel %vm294, 65537, 0
    %v311 = vsel %vm295, 65537, 0
    %v312 = vsel %vm296, 65537, 0
    %v313 = vsel %vm297, 65537, 0
    %v314 = vsel %vm298, 65537, 0
    %v315 = vsel %vm299, 65537, 0
    %v316 = vunpack.c.l.b16 %v300
    %v317 = vunpack.c.l.b16 %v301
    %v318 = vunpack.c.l.b16 %v302
    %v319 = vunpack.c.l.b16 %v303
    %v320 = vunpack.c.l.b16 %v304
    %v321 = vunpack.c.l.b16 %v305
    %v322 = vunpack.c.l.b16 %v306
    %v323 = vunpack.c.l.b16 %v307
    %v324 = vunpack.c.l.b16 %v308
    %v325 = vunpack.c.l.b16 %v309
    %v326 = vunpack.c.l.b16 %v310
    %v327 = vunpack.c.l.b16 %v311
    %v328 = vunpack.c.l.b16 %v312
    %v329 = vunpack.c.l.b16 %v313
    %v330 = vunpack.c.l.b16 %v314
    %v331 = vunpack.c.l.b16 %v315
    %vm332 = vcmp.ne.s32.totalorder %v316, 0
    %vm333 = vcmp.ne.s32.totalorder %v317, 0
    %vm334 = vcmp.ne.s32.totalorder %v318, 0
    %vm335 = vcmp.ne.s32.totalorder %v319, 0
    %vm336 = vcmp.ne.s32.totalorder %v320, 0
    %vm337 = vcmp.ne.s32.totalorder %v321, 0
    %vm338 = vcmp.ne.s32.totalorder %v322, 0
    %vm339 = vcmp.ne.s32.totalorder %v323, 0
    %vm340 = vcmp.ne.s32.totalorder %v324, 0
    %vm341 = vcmp.ne.s32.totalorder %v325, 0
    %vm342 = vcmp.ne.s32.totalorder %v326, 0
    %vm343 = vcmp.ne.s32.totalorder %v327, 0
    %vm344 = vcmp.ne.s32.totalorder %v328, 0
    %vm345 = vcmp.ne.s32.totalorder %v329, 0
    %vm346 = vcmp.ne.s32.totalorder %v330, 0
    %vm347 = vcmp.ne.s32.totalorder %v331, 0
    %v348 = vsel %vm332, 1, 0
    %v349 = vsel %vm333, 1, 0
    %v350 = vsel %vm334, 1, 0
    %v351 = vsel %vm335, 1, 0
    %v352 = vsel %vm336, 1, 0
    %v353 = vsel %vm337, 1, 0
    %v354 = vsel %vm338, 1, 0
    %v355 = vsel %vm339, 1, 0
    %v356 = vsel %vm340, 1, 0
    %v357 = vsel %vm341, 1, 0
    %v358 = vsel %vm342, 1, 0
    %v359 = vsel %vm343, 1, 0
    %v360 = vsel %vm344, 1, 0
    %v361 = vsel %vm345, 1, 0
    %v362 = vsel %vm346, 1, 0
    %v363 = vsel %vm347, 1, 0
    %364 = vset.pattern.permute.xlu0 0
    %365 = vperm.xlu0 %364, %v348
    %v366 = vpop.permute.xlu0 %365
    %367 = vset.pattern.permute.xlu0 0
    %368 = vperm.xlu0 %367, %v349
    %v369 = vpop.permute.xlu0 %368
    %370 = vset.pattern.permute.xlu0 0
    %371 = vperm.xlu0 %370, %v350
    %v372 = vpop.permute.xlu0 %371
    %373 = vset.pattern.permute.xlu0 0
    %374 = vperm.xlu0 %373, %v351
    %v375 = vpop.permute.xlu0 %374
    %376 = vset.pattern.permute.xlu0 0
    %377 = vperm.xlu0 %376, %v352
    %v378 = vpop.permute.xlu0 %377
    %379 = vset.pattern.permute.xlu0 0
    %380 = vperm.xlu0 %379, %v353
    %v381 = vpop.permute.xlu0 %380
    %382 = vset.pattern.permute.xlu0 0
    %383 = vperm.xlu0 %382, %v354
    %v384 = vpop.permute.xlu0 %383
    %385 = vset.pattern.permute.xlu0 0
    %386 = vperm.xlu0 %385, %v355
    %v387 = vpop.permute.xlu0 %386
    %388 = vset.pattern.permute.xlu0 0
    %389 = vperm.xlu0 %388, %v356
    %v390 = vpop.permute.xlu0 %389
    %391 = vset.pattern.permute.xlu0 0
    %392 = vperm.xlu0 %391, %v357
    %v393 = vpop.permute.xlu0 %392
    %394 = vset.pattern.permute.xlu0 0
    %395 = vperm.xlu0 %394, %v358
    %v396 = vpop.permute.xlu0 %395
    %397 = vset.pattern.permute.xlu0 0
    %398 = vperm.xlu0 %397, %v359
    %v399 = vpop.permute.xlu0 %398
    %400 = vset.pattern.permute.xlu0 0
    %401 = vperm.xlu0 %400, %v360
    %v402 = vpop.permute.xlu0 %401
    %403 = vset.pattern.permute.xlu0 0
    %404 = vperm.xlu0 %403, %v361
    %v405 = vpop.permute.xlu0 %404
    %406 = vset.pattern.permute.xlu0 0
    %407 = vperm.xlu0 %406, %v362
    %v408 = vpop.permute.xlu0 %407
    %409 = vset.pattern.permute.xlu0 0
    %410 = vperm.xlu0 %409, %v363
    %v411 = vpop.permute.xlu0 %410
    %vm412 = vcmp.eq.s32.totalorder %v366, 1
    %vm413 = vcmp.eq.s32.totalorder %v369, 1
    %vm414 = vcmp.eq.s32.totalorder %v372, 1
    %vm415 = vcmp.eq.s32.totalorder %v375, 1
    %vm416 = vcmp.eq.s32.totalorder %v378, 1
    %vm417 = vcmp.eq.s32.totalorder %v381, 1
    %vm418 = vcmp.eq.s32.totalorder %v384, 1
    %vm419 = vcmp.eq.s32.totalorder %v387, 1
    %vm420 = vcmp.eq.s32.totalorder %v390, 1
    %vm421 = vcmp.eq.s32.totalorder %v393, 1
    %vm422 = vcmp.eq.s32.totalorder %v396, 1
    %vm423 = vcmp.eq.s32.totalorder %v399, 1
    %vm424 = vcmp.eq.s32.totalorder %v402, 1
    %vm425 = vcmp.eq.s32.totalorder %v405, 1
    %vm426 = vcmp.eq.s32.totalorder %v408, 1
    %vm427 = vcmp.eq.s32.totalorder %v411, 1
    %v428 = vsel %vm412, %v220, 0.0
    %v429 = vsel %vm413, %v221, 0.0
    %v430 = vsel %vm414, %v222, 0.0
    %v431 = vsel %vm415, %v223, 0.0
    %v432 = vsel %vm416, %v224, 0.0
    %v433 = vsel %vm417, %v225, 0.0
    %v434 = vsel %vm418, %v226, 0.0
    %v435 = vsel %vm419, %v227, 0.0
    %v436 = vsel %vm420, %v228, 0.0
    %v437 = vsel %vm421, %v229, 0.0
    %v438 = vsel %vm422, %v230, 0.0
    %v439 = vsel %vm423, %v231, 0.0
    %v440 = vsel %vm424, %v232, 0.0
    %v441 = vsel %vm425, %v233, 0.0
    %v442 = vsel %vm426, %v234, 0.0
    %v443 = vsel %vm427, %v235, 0.0
    %v444 = vld [vmem:[#allocation2] sm:$0xff]
    %vm445 = vcmask 261120
    %v446 = vsel %vm445, %v428, 0.0
    %v447 = vsel %vm445, %v429, 0.0
    %v448 = vadd.f32 %v446, %v447
    %v449 = vsel %vm445, %v430, 0.0
    %v450 = vadd.f32 %v448, %v449
    %v451 = vsel %vm445, %v431, 0.0
    %v452 = vadd.f32 %v450, %v451
    %v453 = vsel %vm445, %v432, 0.0
    %v454 = vadd.f32 %v452, %v453
    %v455 = vsel %vm445, %v433, 0.0
    %v456 = vadd.f32 %v454, %v455
    %v457 = vsel %vm445, %v434, 0.0
    %v458 = vadd.f32 %v456, %v457
    %v459 = vsel %vm445, %v435, 0.0
    %v460 = vadd.f32 %v458, %v459
    %v461 = vsel %vm445, %v436, 0.0
    %v462 = vadd.f32 %v460, %v461
    %v463 = vsel %vm445, %v437, 0.0
    %v464 = vadd.f32 %v462, %v463
    %v465 = vsel %vm445, %v438, 0.0
    %v466 = vadd.f32 %v464, %v465
    %v467 = vsel %vm445, %v439, 0.0
    %v468 = vadd.f32 %v466, %v467
    %v469 = vsel %vm445, %v440, 0.0
    %v470 = vadd.f32 %v468, %v469
    %v471 = vsel %vm445, %v441, 0.0
    %v472 = vadd.f32 %v470, %v471
    %v473 = vsel %vm445, %v442, 0.0
    %v474 = vadd.f32 %v472, %v473
    %v475 = vsel %vm445, %v443, 0.0
    %v476 = vadd.f32 %v474, %v475
    %v477 = vadd.f32 %v444, %v476
    %478 = vst.msk [vmem:[#allocation2] sm:$0xff] %vm445, %v477
    // Predicated region
    $region18: #{tpu_custom_call.1} parent=1 // pred_check
      %p479 = pneg %p114
    $region19: #{tpu_custom_call.1} parent=1 // pred_check_branch
      %481 = sbr.rel (%p479) target = $region21
    $region20: #{tpu_custom_call.1} parent=1 // pred_region
      %v482 = vld [vmem:[#allocation2] sm:$0xff]
      %483 = vst.msk [vmem:[#allocation3] sm:$0xff] %vm445, %v482
    $region21: #{tpu_custom_call.1} parent=1 // pred_fallthru
      _
    // Predicated region
    $region22: #{tpu_custom_call.1} parent=1 // pred_check
      _
    $region23: #{tpu_custom_call.1} parent=1 // pred_check_branch
      %485 = sbr.rel (0) target = $region25
    $region24: #{tpu_custom_call.1} parent=1 // pred_region
      %s487 = ssub.s32 128, 128
      %488 = vsyncadd [#allocation4], %s487
      %s490 = sshll.u32 [#allocation3], 4
      %s491 = int_to_ptr.vmem [resolvable:$true] %s490
      %493 = dma.vmem_to_hbm [thread:$0]  %s491, 128, %s3, [#allocation4]
    $region25: #{tpu_custom_call.1} parent=1 // pred_fallthru
      _
    // Predicated region
    $region26: #{tpu_custom_call.1} parent=1 // pred_check
      _
    $region27: #{tpu_custom_call.1} parent=1 // pred_check_branch
      %495 = sbr.rel (0) target = $region29
    $region28: #{tpu_custom_call.1} parent=1 // pred_region
      %496 = dma.done [#allocation4], 128
    $region29: #{tpu_custom_call.1} parent=1 // pred_fallthru
      _
    %497 = vsyncpa [#allocation4], 1

</llo_original>
